<compile_context>
chip_gen: v7x
topology: tpu7x:2x2x1
jax: 0.10.0
libtpu: 0.0.40
codegen_flags: <defaults>
</compile_context>

<pallas_src>
import functools

import jax
import jax.numpy as jnp
from jax import lax
from jax.experimental import pallas as pl
from jax.experimental.pallas import tpu as pltpu

LANES = 128


def _round_up(x, m):
    return (x + m - 1) // m * m


def _sumsq_kernel(yhat_ref, y_ref, out_ref, *, rows, tile_rows, steps,
                  need_mask):
    """Accumulates per-(sublane, lane) partial sums of (yhat - y)^2 into the
    resident (8, 128) output block owned by the current core."""
    c = pl.program_id(0)   # parallel axis (TensorCore shard)
    j = pl.program_id(1)   # reduction axis over row-blocks

    @pl.when(j == 0)
    def _init():
        out_ref[...] = jnp.zeros_like(out_ref)

    d = yhat_ref[...].astype(jnp.float32) - y_ref[...].astype(jnp.float32)
    d2 = d * d

    if need_mask:
        blk = c * steps + j
        row_idx = blk * tile_rows + lax.broadcasted_iota(
            jnp.int32, (tile_rows, LANES), 0)
        d2 = jnp.where(row_idx < rows, d2, 0.0)

    # (tile_rows, 128) -> (tile_rows//8, 8, 128) is a vreg reinterpretation;
    # the axis-0 reduction is plain VPU adds (no XLU / scalar on the hot path).
    out_ref[...] += jnp.sum(d2.reshape(tile_rows // 8, 8, LANES), axis=0)


def rmse_loss(yhat, y, eps=1e-6, max_tile_rows=4096):
    assert yhat.shape == y.shape, "RMSELoss expects matching shapes"
    n_elems = int(yhat.size)
    assert n_elems > 0

    # Sublane granularity depends on dtype packing (f32 -> 8, bf16 -> 16, ...).
    itemsize = jnp.dtype(yhat.dtype).itemsize
    sub = 8 * max(1, 4 // max(1, itemsize))
    chunk = sub * LANES

    # Flatten in the native dtype (free metadata reshape, no cast). Pad only
    # when the element count is not a multiple of the sublane chunk; the demo
    # shape (2*4*16*16 = 2048) needs no pad. Padded zeros contribute nothing.
    yhat_f = jnp.reshape(yhat, (-1,))
    y_f = jnp.reshape(y, (-1,))
    if n_elems % chunk != 0:
        pad = _round_up(n_elems, chunk) - n_elems
        yhat_f = jnp.pad(yhat_f, (0, pad))
        y_f = jnp.pad(y_f, (0, pad))

    rows = yhat_f.size // LANES          # always a multiple of `sub`
    yhat_2d = yhat_f.reshape(rows, LANES)
    y_2d = y_f.reshape(rows, LANES)

    tile_rows = min(rows, _round_up(max_tile_rows, sub))
    num_blocks = pl.cdiv(rows, tile_rows)

    # Shard row-blocks across 2 TensorCores when there is enough work.
    ncores = 2 if num_blocks >= 2 else 1
    steps = pl.cdiv(num_blocks, ncores)
    need_mask = (ncores * steps * tile_rows) != rows

    if ncores * steps == num_blocks:
        def in_map(c, j):
            return (c * steps + j, 0)
    else:
        def in_map(c, j):
            # Clamp overflow grid points onto the last real block; the
            # in-kernel row mask zeroes their contribution.
            return (jnp.minimum(c * steps + j, num_blocks - 1), 0)

    kernel = functools.partial(
        _sumsq_kernel,
        rows=rows, tile_rows=tile_rows, steps=steps, need_mask=need_mask)

    partials = pl.pallas_call(
        kernel,
        out_shape=jax.ShapeDtypeStruct((ncores * 8, LANES), jnp.float32),
        grid_spec=pltpu.PrefetchScalarGridSpec(
            num_scalar_prefetch=0,
            grid=(ncores, steps),
            in_specs=[
                pl.BlockSpec((tile_rows, LANES), in_map),
                pl.BlockSpec((tile_rows, LANES), in_map),
            ],
            out_specs=pl.BlockSpec((8, LANES), lambda c, j: (c, 0)),
        ),
        compiler_params=pltpu.CompilerParams(
            dimension_semantics=("parallel", "arbitrary")),
    )(yhat_2d, y_2d)

    # Tiny final combine on 8*128*ncores floats: mean over TRUE element count,
    # add eps, sqrt — matches torch.sqrt(MSELoss(yhat, y) + eps).
    mse = jnp.sum(partials) / jnp.float32(n_elems)
    return jnp.sqrt(mse + jnp.float32(eps))


if __name__ == "__main__":
    key = jax.random.PRNGKey(0)
    k1, k2 = jax.random.split(key)
    # NCHW regression target shape: (2, 4, 16, 16).
    yhat = jax.random.normal(k1, (2, 4, 16, 16), dtype=jnp.float32)
    y = jax.random.normal(k2, (2, 4, 16, 16), dtype=jnp.float32)

    loss = jax.jit(rmse_loss)(yhat, y)
    jax.block_until_ready(loss)

    # Reference check against plain JAX.
    ref = jnp.sqrt(jnp.mean((yhat - y) ** 2) + 1e-6)
    assert jnp.allclose(loss, ref, rtol=1e-5, atol=1e-6), (loss, ref)

    print("KERNEL_OK")
</pallas_src>

<mosaic_0001>
module attributes {stable_mosaic.version = 11 : i64} {
  func.func @_sumsq_kernel(%arg0: i32, %arg1: i32, %arg2: memref<16x128xf32, #tpu.memory_space<vmem>>, %arg3: memref<16x128xf32, #tpu.memory_space<vmem>>, %arg4: memref<8x128xf32, #tpu.memory_space<vmem>>) attributes {dimension_semantics = [#tpu.dimension_semantics<parallel>, #tpu.dimension_semantics<arbitrary>], iteration_bounds = array<i64: 1, 1>, scalar_prefetch = 0 : i64, scratch_operands = 0 : i64, tpu.core_type = #tpu.core_type<tc>, window_params = [{transform_indices = @transform_0, window_bounds = array<i64: 16, 128>}, {transform_indices = @transform_1, window_bounds = array<i64: 16, 128>}, {transform_indices = @transform_2, window_bounds = array<i64: 8, 128>}]} {
    %c0_i32 = arith.constant 0 : i32
    %0 = arith.cmpi eq, %arg1, %c0_i32 : i32
    %1 = arith.extui %0 : i1 to i32
    %c0_i32_0 = arith.constant 0 : i32
    %2 = arith.cmpi ne, %1, %c0_i32_0 : i32
    scf.if %2 {
      %cst_8 = arith.constant 0.000000e+00 : f32
      %12 = vector.broadcast %cst_8 : f32 to vector<8x128xf32>
      %c0_9 = arith.constant 0 : index
      %c0_10 = arith.constant 0 : index
      %13 = vector.load %arg4[%c0_9, %c0_10] : memref<8x128xf32, #tpu.memory_space<vmem>>, vector<8x128xf32>
      tpu.vector_store %arg4[%c0_9, %c0_10], %12 {strides = array<i32>} : memref<8x128xf32, #tpu.memory_space<vmem>>, vector<8x128xf32>,
    } else {
    }
    %c0 = arith.constant 0 : index
    %c0_1 = arith.constant 0 : index
    %3 = vector.load %arg2[%c0, %c0_1] : memref<16x128xf32, #tpu.memory_space<vmem>>, vector<16x128xf32>
    %c0_2 = arith.constant 0 : index
    %c0_3 = arith.constant 0 : index
    %4 = vector.load %arg3[%c0_2, %c0_3] : memref<16x128xf32, #tpu.memory_space<vmem>>, vector<16x128xf32>
    %5 = arith.subf %3, %4 : vector<16x128xf32>
    %6 = arith.mulf %5, %5 : vector<16x128xf32>
    %c0_4 = arith.constant 0 : index
    %c0_5 = arith.constant 0 : index
    %7 = vector.load %arg4[%c0_4, %c0_5] : memref<8x128xf32, #tpu.memory_space<vmem>>, vector<8x128xf32>
    %8 = vector.shape_cast %6 : vector<16x128xf32> to vector<2x8x128xf32>
    %cst = arith.constant dense<0.000000e+00> : vector<8x128xf32>
    %9 = vector.multi_reduction <add>, %8, %cst [0] : vector<2x8x128xf32> to vector<8x128xf32>
    %10 = arith.addf %7, %9 : vector<8x128xf32>
    %c0_6 = arith.constant 0 : index
    %c0_7 = arith.constant 0 : index
    %11 = vector.load %arg4[%c0_6, %c0_7] : memref<8x128xf32, #tpu.memory_space<vmem>>, vector<8x128xf32>
    tpu.vector_store %arg4[%c0_6, %c0_7], %10 {strides = array<i32>} : memref<8x128xf32, #tpu.memory_space<vmem>>, vector<8x128xf32>,
    return
  }
  func.func @transform_0(%arg0: i32, %arg1: i32) -> (i32, i32) {
    %c1_i32 = arith.constant 1 : i32
    %0 = arith.muli %arg0, %c1_i32 : i32
    %1 = arith.addi %0, %arg1 : i32
    %c0_i32 = arith.constant 0 : i32
    %c0_i32_0 = arith.constant 0 : i32
    return %1, %c0_i32 : i32, i32
  }
  func.func @transform_1(%arg0: i32, %arg1: i32) -> (i32, i32) {
    %c1_i32 = arith.constant 1 : i32
    %0 = arith.muli %arg0, %c1_i32 : i32
    %1 = arith.addi %0, %arg1 : i32
    %c0_i32 = arith.constant 0 : i32
    %c0_i32_0 = arith.constant 0 : i32
    return %1, %c0_i32 : i32, i32
  }
  func.func @transform_2(%arg0: i32, %arg1: i32) -> (i32, i32) {
    %c0_i32 = arith.constant 0 : i32
    %c0_i32_0 = arith.constant 0 : i32
    return %arg0, %c0_i32 : i32, i32
  }
}

</mosaic_0001>

<llo_original>
// kernel: rmse_loss.1
$region0: #{rmse_loss.1}
  #allocation0 [shape = 'u32[]', space=smem, size = 0x4, offset = 0x4, fixed_abs, tag = 'smem constant byte address 0x4 - core index']
  #allocation1 [shape = 'u32[144,128]{1,0:T(1,128)}', space=vmem, size = 0x12000, scoped, tag = 'internal scratch']
  %s0 = inlined_call_operand.vmem [shape: f32[16,128], index: 0, kind: input, shape index: {}]
  %s1 = inlined_call_operand.vmem [shape: f32[16,128], index: 1, kind: input, shape index: {}]
  %s2 = inlined_call_operand.vmem [shape: f32[8,128], index: 2, kind: output, shape index: {}]
  %s3 = sld [smem:[#allocation0]]
  $region22: #{rmse_loss.1} parent=0
    _
  %s5 = ssub.s32 1, %s3
  %s6 = scalar_select 0, %s5, %s3
  // Predicated region
  $region2: #{rmse_loss.1} parent=0 // pred_check
    _
  $region3: #{rmse_loss.1} parent=0 // pred_check_branch
    %8 = sbr.rel (0) target = $region5
  $region4: #{rmse_loss.1} parent=0 // pred_region
    %s9 = sadd.s32 0, 0
    %s10 = smul.u32 2, %s9
    %p11 = scmp.lt.s32.totalorder %s10, 1
    %s12 = scalar_select %p11, %s10, 1
    %s13 = smul.addr %s12, 8
    %s14 = scalar_lea.vmem %s0, %s13
    %s15 = sadd.s32 0, 0
    %s16 = smul.u32 2, %s15
  $region5: #{rmse_loss.1} parent=0 // pred_fallthru
    _
  // Predicated region
  $region6: #{rmse_loss.1} parent=0 // pred_check
    _
  $region7: #{rmse_loss.1} parent=0 // pred_check_branch
    %18 = sbr.rel (0) target = $region9
  $region8: #{rmse_loss.1} parent=0 // pred_region
    %s19 = sadd.s32 0, 0
    %s20 = smul.u32 2, %s19
    %p21 = scmp.lt.s32.totalorder %s20, 1
    %s22 = scalar_select %p21, %s20, 1
    %s23 = smul.addr %s22, 8
    %s24 = scalar_lea.vmem %s1, %s23
    %s25 = sadd.s32 0, 0
    %s26 = smul.u32 2, %s25
  $region9: #{rmse_loss.1} parent=0 // pred_fallthru
    _
  %s27 = sadd.s32 0, 0
  %s28 = smul.u32 2, %s27
  %p29 = scmp.lt.s32.totalorder %s28, 1
  %s30 = scalar_select %p29, %s28, 1
  %s31 = smul.addr %s30, 8
  %s32 = scalar_lea.vmem %s0, %s31
  %s33 = sadd.s32 0, 0
  %s34 = smul.u32 2, %s33
  %p35 = scmp.lt.s32.totalorder %s34, 1
  %s36 = scalar_select %p35, %s34, 1
  %s37 = smul.addr %s36, 8
  %s38 = scalar_lea.vmem %s1, %s37
  %s39 = sadd.s32 0, 0
  %s40 = smul.u32 2, %s39
  %p41 = scmp.lt.s32.totalorder %s40, 1
  %s42 = scalar_select %p41, %s40, 1
  %s43 = smul.addr %s42, 8
  %s44 = scalar_lea.vmem %s0, %s43
  %s45 = sadd.s32 0, 0
  %s46 = smul.u32 2, %s45
  %s47 = sadd.s32 0, 0
  %s48 = smul.u32 2, %s47
  %p49 = scmp.lt.s32.totalorder %s48, 1
  %s50 = scalar_select %p49, %s48, 1
  %s51 = smul.addr %s50, 8
  %s52 = scalar_lea.vmem %s1, %s51
  %s53 = sadd.s32 0, 0
  %s54 = smul.u32 2, %s53
  %p55 = scmp.eq.s32.totalorder 0, 0
  // Predicated region
  $region10: #{rmse_loss.1} parent=0 // pred_check
    %p56 = pneg %p55
  $region11: #{rmse_loss.1} parent=0 // pred_check_branch
    %58 = sbr.rel (%p56) target = $region13
  $region12: #{rmse_loss.1} parent=0 // pred_region
    %59 = vst [vmem:[%s2] sm:$0xff] 0.0
  $region13: #{rmse_loss.1} parent=0 // pred_fallthru
    _
  %v60 = vld [vmem:[%s44] sm:$0xff]
  %v61 = vld [vmem:[%s44 + $0x8] sm:$0xff]
  %v62 = vld [vmem:[%s52] sm:$0xff]
  %v63 = vld [vmem:[%s52 + $0x8] sm:$0xff]
  %v64 = vsub.f32 %v60, %v62
  %v65 = vsub.f32 %v61, %v63
  %v66 = vmul.f32 %v64, %v64
  %v67 = vmul.f32 %v65, %v65
  %v68 = vld [vmem:[%s2] sm:$0xff]
  %v69 = vadd.f32 %v66, %v67
  %v70 = vadd.f32 %v68, %v69
  %71 = vst [vmem:[%s2] sm:$0xff] %v70
  // Predicated region
  $region14: #{rmse_loss.1} parent=0 // pred_check
    _
  $region15: #{rmse_loss.1} parent=0 // pred_check_branch
    %73 = sbr.rel (0) target = $region17
  $region16: #{rmse_loss.1} parent=0 // pred_region
    _
  $region17: #{rmse_loss.1} parent=0 // pred_fallthru
    _
  // Predicated region
  $region18: #{rmse_loss.1} parent=0 // pred_check
    _
  $region19: #{rmse_loss.1} parent=0 // pred_check_branch
    %75 = sbr.rel (0) target = $region21
  $region20: #{rmse_loss.1} parent=0 // pred_region
    _
  $region21: #{rmse_loss.1} parent=0 // pred_fallthru
    _

</llo_original>
